<compile_context>
chip_gen: v5e
topology: v5e:2x2
jax: 0.10.0
libtpu: 0.0.40
codegen_flags: <defaults>
</compile_context>

<pallas_src>
import numpy as np
import jax
import jax.numpy as jnp
from jax.experimental import pallas as pl
from jax.experimental.pallas import tpu as pltpu


def basic_block_kernel(x_ref, w1_ref, b1_ref, w2_ref, b2_ref, out_ref):
    """Fused BasicBlock forward for one image.

    x_ref  : (1, H, W*Cin)        lane-dense input (also serves as the residual)
    w1_ref : (3, W*Cin, W*Cout)   banded conv1 weight (BN1 scale folded in)
    b1_ref : (1, W*Cout)          BN1 bias, tiled per W position
    w2_ref : (3, W*Cout, W*Cout)  banded conv2 weight (BN2 scale folded in)
    b2_ref : (1, W*Cout)          BN2 bias, tiled per W position
    out_ref: (1, H, W*Cout)
    """
    x = x_ref[0]                                  # (H, W*Cin), f32

    def conv3x3_band(inp, w_ref):
        # One large-K matmul per kernel row dh; the band encodes the W taps and the
        # channel contraction (zero W-borders are implicit in the band). The H taps
        # become +/-1 row shifts of the matmul results with zeroed border rows.
        c0 = jnp.dot(inp, w_ref[0], preferred_element_type=jnp.float32)
        c1 = jnp.dot(inp, w_ref[1], preferred_element_type=jnp.float32)
        c2 = jnp.dot(inp, w_ref[2], preferred_element_type=jnp.float32)
        zrow = jnp.zeros_like(c1[:1])
        down = jnp.concatenate([zrow, c0[:-1]], axis=0)   # out[h] += inp[h-1] @ w[0]
        up = jnp.concatenate([c2[1:], zrow], axis=0)      # out[h] += inp[h+1] @ w[2]
        return down + c1 + up

    # conv1 + folded bn1 + relu
    y1 = jnp.maximum(conv3x3_band(x, w1_ref) + b1_ref[...], 0.0)
    # conv2 + folded bn2 + residual add + relu  (identity shortcut: Cin == Cout)
    y2 = conv3x3_band(y1, w2_ref) + b2_ref[...]
    out_ref[0] = jnp.maximum(y2 + x, 0.0).astype(out_ref.dtype)


def svd_conv3x3_weight(N_param, C_param, Sigma, out_c, in_c, k=3):
    """weight = N @ diag(|Sigma|) @ C, reshaped to OIHW (Cout, Cin, k, k)."""
    w = (N_param * jnp.abs(Sigma)[None, :]) @ C_param
    return w.reshape(out_c, in_c, k, k)


def fold_bn(gamma, beta, mean, var, eps=1e-5):
    scale = gamma / jnp.sqrt(var + eps)
    bias = beta - mean * scale
    return scale, bias


def build_band_weight(w_oihw, scale, W):
    """(Cout,Cin,3,3) conv weight -> (3, W*Cin, W*Cout) banded matmul weight.

    band[dh, q*Cin+ci, w*Cout+co] = w[co, ci, dh, dw] * scale[co]  with dw = q - w + 1
    when dw in [0, 2], else 0.  The zeros also realize the conv's W zero-padding, so
    the activation never needs a padded copy along W.
    """
    Cout, Cin = w_oihw.shape[0], w_oihw.shape[1]
    w_t = jnp.transpose(w_oihw, (2, 3, 1, 0)) * scale[None, None, None, :]  # (3,3,Cin,Cout)
    q = jnp.arange(W)[:, None]
    wv = jnp.arange(W)[None, :]
    dw = q - wv + 1                                               # (W, W)
    valid = ((dw >= 0) & (dw <= 2)).astype(w_t.dtype)[None, :, :, None, None]
    dwc = jnp.clip(dw, 0, 2)
    band = w_t[:, dwc] * valid                                    # (3, W, W, Cin, Cout)
    band = jnp.transpose(band, (0, 1, 3, 2, 4))                   # (3, W, Cin, W, Cout)
    return band.reshape(3, W * Cin, W * Cout)


def basic_block_pallas(x_nchw, params):
    """BasicBlock forward (stride=1, downsample=None, decompose_type='channel')."""
    Nb, Cin, H, W = x_nchw.shape
    Cout = params["planes"]
    # Identity shortcut only (stride=1, no downsample): residual add requires Cin == Cout.
    assert Cin == Cout, "identity shortcut requires inplanes == planes"

    w1 = svd_conv3x3_weight(params["N1"], params["C1"], params["S1"], Cout, Cin)
    w2 = svd_conv3x3_weight(params["N2"], params["C2"], params["S2"], Cout, Cout)
    s1, b1 = fold_bn(params["g1"], params["be1"], params["m1"], params["v1"])
    s2, b2 = fold_bn(params["g2"], params["be2"], params["m2"], params["v2"])

    # BN scale folded into the band weights; bias tiled to a lane-dense row.
    w1_band = build_band_weight(w1, s1, W).astype(jnp.float32)    # (3, W*Cin,  W*Cout)
    w2_band = build_band_weight(w2, s2, W).astype(jnp.float32)    # (3, W*Cout, W*Cout)
    b1_row = jnp.tile(b1, W).reshape(1, W * Cout).astype(jnp.float32)
    b2_row = jnp.tile(b2, W).reshape(1, W * Cout).astype(jnp.float32)

    # NCHW -> NHWC -> lane-dense rows (N, H, W*Cin)
    x_rows = jnp.transpose(x_nchw, (0, 2, 3, 1)).reshape(Nb, H, W * Cin).astype(jnp.float32)

    out_rows = pl.pallas_call(
        basic_block_kernel,
        out_shape=jax.ShapeDtypeStruct((Nb, H, W * Cout), jnp.float32),
        grid=(Nb,),
        in_specs=[
            pl.BlockSpec((1, H, W * Cin), lambda n: (n, 0, 0)),
            pl.BlockSpec((3, W * Cin, W * Cout), lambda n: (0, 0, 0)),
            pl.BlockSpec((1, W * Cout), lambda n: (0, 0)),
            pl.BlockSpec((3, W * Cout, W * Cout), lambda n: (0, 0, 0)),
            pl.BlockSpec((1, W * Cout), lambda n: (0, 0)),
        ],
        out_specs=pl.BlockSpec((1, H, W * Cout), lambda n: (n, 0, 0)),
        compiler_params=pltpu.CompilerParams(
            dimension_semantics=("parallel",),
            vmem_limit_bytes=48 * 1024 * 1024,
        ),
    )(x_rows, w1_band, b1_row, w2_band, b2_row)

    # lane-dense (N, H, W*Cout) -> NCHW to match the PyTorch module's convention
    return jnp.transpose(out_rows.reshape(Nb, H, W, Cout), (0, 3, 1, 2))


def basic_block_reference(x_nchw, params):
    """Pure-JAX reference (lax conv) for correctness checking."""
    Nb, Cin, H, W = x_nchw.shape
    w1 = svd_conv3x3_weight(params["N1"], params["C1"], params["S1"], params["planes"], Cin)
    w2 = svd_conv3x3_weight(params["N2"], params["C2"], params["S2"],
                            params["planes"], params["planes"])
    s1, b1 = fold_bn(params["g1"], params["be1"], params["m1"], params["v1"])
    s2, b2 = fold_bn(params["g2"], params["be2"], params["m2"], params["v2"])

    dn = jax.lax.conv_dimension_numbers(x_nchw.shape, w1.shape, ("NCHW", "OIHW", "NCHW"))
    conv = lambda x, w: jax.lax.conv_general_dilated(
        x, w, window_strides=(1, 1), padding=((1, 1), (1, 1)),
        dimension_numbers=dn, precision=jax.lax.Precision.HIGHEST)

    y = conv(x_nchw, w1)
    y = y * s1[None, :, None, None] + b1[None, :, None, None]
    y = jnp.maximum(y, 0.0)
    y = conv(y, w2)
    y = y * s2[None, :, None, None] + b2[None, :, None, None]
    y = jnp.maximum(y + x_nchw, 0.0)
    return y


if __name__ == "__main__":
    key = jax.random.PRNGKey(0)
    keys = jax.random.split(key, 8)

    # BasicBlock(inplanes=8, planes=8, stride=1, downsample=None); W*C = 128 (lane-dense)
    Nb, Cin, H, W = 2, 8, 16, 16
    planes = Cin
    k = 3

    x = jax.random.normal(keys[0], (Nb, Cin, H, W), jnp.float32)

    def kaiming(rng, shape):  # kaiming_normal_ (fan_in mode) approximation
        fan_in = shape[1]
        return jax.random.normal(rng, shape, jnp.float32) * np.sqrt(2.0 / fan_in)

    r1 = min(planes, Cin * k * k)
    r2 = min(planes, planes * k * k)
    params = dict(
        planes=planes,
        # conv1 SVD factors
        N1=kaiming(keys[1], (planes, r1)),
        C1=kaiming(keys[2], (r1, Cin * k * k)),
        S1=jax.random.normal(keys[3], (r1,), jnp.float32),
        # conv2 SVD factors
        N2=kaiming(keys[4], (planes, r2)),
        C2=kaiming(keys[5], (r2, planes * k * k)),
        S2=jax.random.normal(keys[6], (r2,), jnp.float32),
        # BatchNorm params / running stats (nn.BatchNorm2d defaults, eval mode)
        g1=jnp.ones((planes,), jnp.float32), be1=jnp.zeros((planes,), jnp.float32),
        m1=jnp.zeros((planes,), jnp.float32), v1=jnp.ones((planes,), jnp.float32),
        g2=jnp.ones((planes,), jnp.float32), be2=jnp.zeros((planes,), jnp.float32),
        m2=jnp.zeros((planes,), jnp.float32), v2=jnp.ones((planes,), jnp.float32),
    )

    out = basic_block_pallas(x, params)
    out = jax.block_until_ready(out)

    ref = jax.block_until_ready(basic_block_reference(x, params))
    assert out.shape == (Nb, planes, H, W), out.shape
    np.testing.assert_allclose(np.asarray(out), np.asarray(ref), rtol=2e-2, atol=2e-2)

    print("KERNEL_OK")
</pallas_src>

<mosaic_0001>
module attributes {stable_mosaic.version = 11 : i64} {
  func.func @basic_block_kernel(%arg0: i32, %arg1: memref<1x16x128xf32, #tpu.memory_space<vmem>>, %arg2: memref<3x128x128xf32, #tpu.memory_space<vmem>>, %arg3: memref<1x128xf32, #tpu.memory_space<vmem>>, %arg4: memref<3x128x128xf32, #tpu.memory_space<vmem>>, %arg5: memref<1x128xf32, #tpu.memory_space<vmem>>, %arg6: memref<1x16x128xf32, #tpu.memory_space<vmem>>) attributes {dimension_semantics = [#tpu.dimension_semantics<parallel>], iteration_bounds = array<i64: 2>, scalar_prefetch = 0 : i64, scratch_operands = 0 : i64, tpu.core_type = #tpu.core_type<tc>, window_params = [{transform_indices = @transform_0, window_bounds = array<i64: 1, 16, 128>}, {pipeline_mode = #tpu.pipeline_mode<synchronous>, transform_indices = @transform_1, window_bounds = array<i64: 3, 128, 128>}, {pipeline_mode = #tpu.pipeline_mode<synchronous>, transform_indices = @transform_2, window_bounds = array<i64: 1, 128>}, {pipeline_mode = #tpu.pipeline_mode<synchronous>, transform_indices = @transform_3, window_bounds = array<i64: 3, 128, 128>}, {pipeline_mode = #tpu.pipeline_mode<synchronous>, transform_indices = @transform_4, window_bounds = array<i64: 1, 128>}, {transform_indices = @transform_5, window_bounds = array<i64: 1, 16, 128>}]} {
    %c0 = arith.constant 0 : index
    %c0_0 = arith.constant 0 : index
    %c0_1 = arith.constant 0 : index
    %0 = vector.load %arg1[%c0, %c0_0, %c0_1] : memref<1x16x128xf32, #tpu.memory_space<vmem>>, vector<1x16x128xf32>
    %1 = vector.shape_cast %0 : vector<1x16x128xf32> to vector<16x128xf32>
    %c0_2 = arith.constant 0 : index
    %c0_3 = arith.constant 0 : index
    %c0_4 = arith.constant 0 : index
    %2 = vector.load %arg2[%c0_2, %c0_3, %c0_4] : memref<3x128x128xf32, #tpu.memory_space<vmem>>, vector<1x128x128xf32>
    %3 = vector.shape_cast %2 : vector<1x128x128xf32> to vector<128x128xf32>
    %cst = arith.constant dense<0.000000e+00> : vector<16x128xf32>
    %4 = tpu.matmul %1, %3, %cst {dimension_numbers = #tpu.dot_dimension_numbers<[1], [0], [0], [1], [0, 0, 1, 1], [], []>} : vector<16x128xf32>, vector<128x128xf32>, vector<16x128xf32> -> vector<16x128xf32>
    %c1 = arith.constant 1 : index
    %c0_5 = arith.constant 0 : index
    %c0_6 = arith.constant 0 : index
    %5 = vector.load %arg2[%c1, %c0_5, %c0_6] : memref<3x128x128xf32, #tpu.memory_space<vmem>>, vector<1x128x128xf32>
    %6 = vector.shape_cast %5 : vector<1x128x128xf32> to vector<128x128xf32>
    %cst_7 = arith.constant dense<0.000000e+00> : vector<16x128xf32>
    %7 = tpu.matmul %1, %6, %cst_7 {dimension_numbers = #tpu.dot_dimension_numbers<[1], [0], [0], [1], [0, 0, 1, 1], [], []>} : vector<16x128xf32>, vector<128x128xf32>, vector<16x128xf32> -> vector<16x128xf32>
    %c2 = arith.constant 2 : index
    %c0_8 = arith.constant 0 : index
    %c0_9 = arith.constant 0 : index
    %8 = vector.load %arg2[%c2, %c0_8, %c0_9] : memref<3x128x128xf32, #tpu.memory_space<vmem>>, vector<1x128x128xf32>
    %9 = vector.shape_cast %8 : vector<1x128x128xf32> to vector<128x128xf32>
    %cst_10 = arith.constant dense<0.000000e+00> : vector<16x128xf32>
    %10 = tpu.matmul %1, %9, %cst_10 {dimension_numbers = #tpu.dot_dimension_numbers<[1], [0], [0], [1], [0, 0, 1, 1], [], []>} : vector<16x128xf32>, vector<128x128xf32>, vector<16x128xf32> -> vector<16x128xf32>
    %cst_11 = arith.constant 0.000000e+00 : f32
    %11 = vector.broadcast %cst_11 : f32 to vector<1x128xf32>
    %12 = vector.extract_strided_slice %4 {offsets = [0, 0], sizes = [15, 128], strides = [1, 1]} : vector<16x128xf32> to vector<15x128xf32>
    %13 = tpu.concatenate %11, %12 in 0 : vector<1x128xf32>, vector<15x128xf32> -> vector<16x128xf32>
    %14 = vector.extract_strided_slice %10 {offsets = [1, 0], sizes = [15, 128], strides = [1, 1]} : vector<16x128xf32> to vector<15x128xf32>
    %15 = tpu.concatenate %14, %11 in 0 : vector<15x128xf32>, vector<1x128xf32> -> vector<16x128xf32>
    %16 = arith.addf %13, %7 : vector<16x128xf32>
    %17 = arith.addf %16, %15 : vector<16x128xf32>
    %c0_12 = arith.constant 0 : index
    %c0_13 = arith.constant 0 : index
    %18 = vector.load %arg3[%c0_12, %c0_13] : memref<1x128xf32, #tpu.memory_space<vmem>>, vector<1x128xf32>
    %19 = vector.broadcast %18 : vector<1x128xf32> to vector<16x128xf32>
    %20 = arith.addf %17, %19 : vector<16x128xf32>
    %cst_14 = arith.constant 0.000000e+00 : f32
    %21 = vector.broadcast %cst_14 : f32 to vector<16x128xf32>
    %22 = arith.maximumf %20, %21 : vector<16x128xf32>
    %c0_15 = arith.constant 0 : index
    %c0_16 = arith.constant 0 : index
    %c0_17 = arith.constant 0 : index
    %23 = vector.load %arg4[%c0_15, %c0_16, %c0_17] : memref<3x128x128xf32, #tpu.memory_space<vmem>>, vector<1x128x128xf32>
    %24 = vector.shape_cast %23 : vector<1x128x128xf32> to vector<128x128xf32>
    %cst_18 = arith.constant dense<0.000000e+00> : vector<16x128xf32>
    %25 = tpu.matmul %22, %24, %cst_18 {dimension_numbers = #tpu.dot_dimension_numbers<[1], [0], [0], [1], [0, 0, 1, 1], [], []>} : vector<16x128xf32>, vector<128x128xf32>, vector<16x128xf32> -> vector<16x128xf32>
    %c1_19 = arith.constant 1 : index
    %c0_20 = arith.constant 0 : index
    %c0_21 = arith.constant 0 : index
    %26 = vector.load %arg4[%c1_19, %c0_20, %c0_21] : memref<3x128x128xf32, #tpu.memory_space<vmem>>, vector<1x128x128xf32>
    %27 = vector.shape_cast %26 : vector<1x128x128xf32> to vector<128x128xf32>
    %cst_22 = arith.constant dense<0.000000e+00> : vector<16x128xf32>
    %28 = tpu.matmul %22, %27, %cst_22 {dimension_numbers = #tpu.dot_dimension_numbers<[1], [0], [0], [1], [0, 0, 1, 1], [], []>} : vector<16x128xf32>, vector<128x128xf32>, vector<16x128xf32> -> vector<16x128xf32>
    %c2_23 = arith.constant 2 : index
    %c0_24 = arith.constant 0 : index
    %c0_25 = arith.constant 0 : index
    %29 = vector.load %arg4[%c2_23, %c0_24, %c0_25] : memref<3x128x128xf32, #tpu.memory_space<vmem>>, vector<1x128x128xf32>
    %30 = vector.shape_cast %29 : vector<1x128x128xf32> to vector<128x128xf32>
    %cst_26 = arith.constant dense<0.000000e+00> : vector<16x128xf32>
    %31 = tpu.matmul %22, %30, %cst_26 {dimension_numbers = #tpu.dot_dimension_numbers<[1], [0], [0], [1], [0, 0, 1, 1], [], []>} : vector<16x128xf32>, vector<128x128xf32>, vector<16x128xf32> -> vector<16x128xf32>
    %cst_27 = arith.constant 0.000000e+00 : f32
    %32 = vector.broadcast %cst_27 : f32 to vector<1x128xf32>
    %33 = vector.extract_strided_slice %25 {offsets = [0, 0], sizes = [15, 128], strides = [1, 1]} : vector<16x128xf32> to vector<15x128xf32>
    %34 = tpu.concatenate %32, %33 in 0 : vector<1x128xf32>, vector<15x128xf32> -> vector<16x128xf32>
    %35 = vector.extract_strided_slice %31 {offsets = [1, 0], sizes = [15, 128], strides = [1, 1]} : vector<16x128xf32> to vector<15x128xf32>
    %36 = tpu.concatenate %35, %32 in 0 : vector<15x128xf32>, vector<1x128xf32> -> vector<16x128xf32>
    %37 = arith.addf %34, %28 : vector<16x128xf32>
    %38 = arith.addf %37, %36 : vector<16x128xf32>
    %c0_28 = arith.constant 0 : index
    %c0_29 = arith.constant 0 : index
    %39 = vector.load %arg5[%c0_28, %c0_29] : memref<1x128xf32, #tpu.memory_space<vmem>>, vector<1x128xf32>
    %40 = vector.broadcast %39 : vector<1x128xf32> to vector<16x128xf32>
    %41 = arith.addf %38, %40 : vector<16x128xf32>
    %42 = arith.addf %41, %1 : vector<16x128xf32>
    %cst_30 = arith.constant 0.000000e+00 : f32
    %43 = vector.broadcast %cst_30 : f32 to vector<16x128xf32>
    %44 = arith.maximumf %42, %43 : vector<16x128xf32>
    %c0_31 = arith.constant 0 : index
    %c0_32 = arith.constant 0 : index
    %c0_33 = arith.constant 0 : index
    %45 = vector.load %arg6[%c0_31, %c0_32, %c0_33] : memref<1x16x128xf32, #tpu.memory_space<vmem>>, vector<1x16x128xf32>
    %46 = vector.shape_cast %45 : vector<1x16x128xf32> to vector<16x128xf32>
    %47 = vector.shape_cast %44 : vector<16x128xf32> to vector<1x16x128xf32>
    tpu.vector_store %arg6[%c0_31, %c0_32, %c0_33], %47 {strides = array<i32>} : memref<1x16x128xf32, #tpu.memory_space<vmem>>, vector<1x16x128xf32>,
    return
  }
  func.func @transform_0(%arg0: i32) -> (i32, i32, i32) {
    %c0_i32 = arith.constant 0 : i32
    %c0_i32_0 = arith.constant 0 : i32
    %c0_i32_1 = arith.constant 0 : i32
    return %arg0, %c0_i32, %c0_i32_0 : i32, i32, i32
  }
  func.func @transform_1(%arg0: i32) -> (i32, i32, i32) {
    %c0_i32 = arith.constant 0 : i32
    %c0_i32_0 = arith.constant 0 : i32
    %c0_i32_1 = arith.constant 0 : i32
    %c0_i32_2 = arith.constant 0 : i32
    return %c0_i32, %c0_i32_0, %c0_i32_1 : i32, i32, i32
  }
  func.func @transform_2(%arg0: i32) -> (i32, i32) {
    %c0_i32 = arith.constant 0 : i32
    %c0_i32_0 = arith.constant 0 : i32
    %c0_i32_1 = arith.constant 0 : i32
    return %c0_i32, %c0_i32_0 : i32, i32
  }
  func.func @transform_3(%arg0: i32) -> (i32, i32, i32) {
    %c0_i32 = arith.constant 0 : i32
    %c0_i32_0 = arith.constant 0 : i32
    %c0_i32_1 = arith.constant 0 : i32
    %c0_i32_2 = arith.constant 0 : i32
    return %c0_i32, %c0_i32_0, %c0_i32_1 : i32, i32, i32
  }
  func.func @transform_4(%arg0: i32) -> (i32, i32) {
    %c0_i32 = arith.constant 0 : i32
    %c0_i32_0 = arith.constant 0 : i32
    %c0_i32_1 = arith.constant 0 : i32
    return %c0_i32, %c0_i32_0 : i32, i32
  }
  func.func @transform_5(%arg0: i32) -> (i32, i32, i32) {
    %c0_i32 = arith.constant 0 : i32
    %c0_i32_0 = arith.constant 0 : i32
    %c0_i32_1 = arith.constant 0 : i32
    return %arg0, %c0_i32, %c0_i32_0 : i32, i32, i32
  }
}

</mosaic_0001>

<llo_original>
// kernel: tpu_custom_call.1
$region0: #{tpu_custom_call.1}
  #allocation0 [shape = 'u32[]', space=smem, size = 0x4, offset = 0x4, fixed_abs, tag = 'smem constant byte address 0x4 - core index']
  #allocation1 [shape = 'u32[72,128]{1,0:T(1,128)}', space=vmem, size = 0x9000, scoped, tag = 'internal scratch']
  %s0 = inlined_call_operand.hbm [shape: f32[2,16,128], index: 0, kind: input, shape index: {}]
  %s1 = inlined_call_operand.hbm [shape: f32[3,128,128], index: 1, kind: input, shape index: {}]
  %s2 = inlined_call_operand.vmem [shape: f32[1,128], index: 2, kind: input, shape index: {}]
  %s3 = inlined_call_operand.hbm [shape: f32[3,128,128], index: 3, kind: input, shape index: {}]
  %s4 = inlined_call_operand.vmem [shape: f32[1,128], index: 4, kind: input, shape index: {}]
  %s5 = inlined_call_operand.hbm [shape: f32[2,16,128], index: 5, kind: output, shape index: {}]
  %s6 = sld [smem:[#allocation0]]
  $region65: #{tpu_custom_call.1} parent=0
    _
  %s8 = ssub.s32 1, %s6
  %s9 = scalar_select 0, %s8, %s6
  $region1: #{tpu_custom_call.1} parent=0
    #allocation2 [shape = 'u8[16384]{0}', space=vmem, size = 0x4000, scoped, tag = 'input window, operand 0']
    #allocation3 [shape = 's32[2]{0}', space=sflag, size = 0x8, scoped, tag = 'scoped memory for tpu_custom_call.1']
    #allocation4 [shape = 's32[2]{0}', space=sflag, size = 0x8, scoped, tag = 'scoped memory for tpu_custom_call.1']
    #allocation5 [shape = 'u8[196608]{0}', space=vmem, size = 0x30000, scoped, tag = 'input window, operand 1, single buffered']
    #allocation6 [shape = 's32[1]{0}', space=sflag, size = 0x4, scoped, tag = 'scoped memory for tpu_custom_call.1']
    #allocation7 [shape = 'u8[196608]{0}', space=vmem, size = 0x30000, scoped, tag = 'input window, operand 3, single buffered']
    #allocation8 [shape = 'u8[16384]{0}', space=vmem, size = 0x4000, scoped, tag = 'output window, operand 0']
    %10 = vsyncpa [#allocation3], 0
    %s11 = scalar_lea.sflag [#allocation3], 1
    %12 = vsyncpa %s11, 0
    %13 = vsyncpa [#allocation6], 0
    %14 = vsyncpa [#allocation4], 0
    %s15 = scalar_lea.sflag [#allocation4], 1
    %16 = vsyncpa %s15, 0
    loop: start=0, step=1, limit=4
    $region2: #{tpu_custom_call.1} parent=1 // loop_pre_header
      _
    $region3: #{tpu_custom_call.1} parent=1 // loop_header
      %s18 = sphi 0, %s22
      %p19 = scmp.ge.s32.totalorder %s18, 4
      %s28 = sphi 0, %s30
      %s31 = sphi 0, %s28
      %s32 = sphi 0, %s31
      %s48 = sphi 0, %s32
      %s52 = sphi 0, %s52
      %s54 = sphi 0, %s52
      %s55 = sphi 0, %s54
      %s69 = sphi 0, %s55
      %s73 = sphi 0, %s73
      %s75 = sphi 0, %s73
      %s76 = sphi 0, %s75
      %s90 = sphi 0, %s76
      %s94 = sphi 0, %s94
      %s96 = sphi 0, %s94
      %s97 = sphi 0, %s96
      %s111 = sphi 0, %s97
      %s115 = sphi 0, %s115
      %s117 = sphi 0, %s115
      %s118 = sphi 0, %s117
      %s132 = sphi 0, %s118
      %s138 = sphi 0, %s140
      %s141 = sphi 0, %s138
      %s142 = sphi 0, %s141
      %s158 = sphi 0, %s142
    $region4: #{tpu_custom_call.1} parent=1 // loop_header_branch
      %21 = sbr.rel (%p19) target = $region8
    $region5: #{tpu_custom_call.1} parent=1 // loop_body
      %s23 = ssub.s32 %s18, 1
      %s24 = ssub.s32 %s18, 2
      %s25 = sadd.s32 %s18, 1
      %s26 = ssub.s32 %s18, %s25
      %p27 = scmp.eq.s32.totalorder %s26, 0
      %s29 = sadd.s32 %s28, 1
      %s30 = scalar_select %p27, %s28, %s29
      %p33 = pneg %p27
      %p34 = scmp.eq.s32.totalorder %s18, 1
      %p35 = por %p33, %p34
      %p36 = scmp.ne.s32.totalorder %s28, %s31
      %p37 = scmp.eq.s32.totalorder %s18, 0
      %p38 = por %p36, %p37
      %p39 = scmp.ne.s32.totalorder %s28, %s31
      %p40 = scmp.eq.s32.totalorder %s23, 1
      %p41 = por %p39, %p40
      %p42 = scmp.ne.s32.totalorder %s31, %s32
      %p43 = scmp.eq.s32.totalorder %s23, 0
      %p44 = por %p42, %p43
      %p45 = scmp.ne.s32.totalorder %s31, %s32
      %p46 = scmp.eq.s32.totalorder %s24, 1
      %p47 = por %p45, %p46
      %p49 = scmp.ne.s32.totalorder %s32, %s48
      %p50 = scmp.eq.s32.totalorder %s24, 0
      %p51 = por %p49, %p50
      %s53 = sadd.s32 %s52, 1
      %p56 = scmp.eq.s32.totalorder %s18, 1
      %p57 = scmp.ne.s32.totalorder %s52, %s54
      %p58 = scmp.eq.s32.totalorder %s18, 0
      %p59 = por %p57, %p58
      %p60 = scmp.ne.s32.totalorder %s52, %s54
      %p61 = scmp.eq.s32.totalorder %s23, 1
      %p62 = por %p60, %p61
      %p63 = scmp.ne.s32.totalorder %s54, %s55
      %p64 = scmp.eq.s32.totalorder %s23, 0
      %p65 = por %p63, %p64
      %p66 = scmp.ne.s32.totalorder %s54, %s55
      %p67 = scmp.eq.s32.totalorder %s24, 1
      %p68 = por %p66, %p67
      %p70 = scmp.ne.s32.totalorder %s55, %s69
      %p71 = scmp.eq.s32.totalorder %s24, 0
      %p72 = por %p70, %p71
      %s74 = sadd.s32 %s73, 1
      %p77 = scmp.eq.s32.totalorder %s18, 1
      %p78 = scmp.ne.s32.totalorder %s73, %s75
      %p79 = scmp.eq.s32.totalorder %s18, 0
      %p80 = por %p78, %p79
      %p81 = scmp.ne.s32.totalorder %s73, %s75
      %p82 = scmp.eq.s32.totalorder %s23, 1
      %p83 = por %p81, %p82
      %p84 = scmp.ne.s32.totalorder %s75, %s76
      %p85 = scmp.eq.s32.totalorder %s23, 0
      %p86 = por %p84, %p85
      %p87 = scmp.ne.s32.totalorder %s75, %s76
      %p88 = scmp.eq.s32.totalorder %s24, 1
      %p89 = por %p87, %p88
      %p91 = scmp.ne.s32.totalorder %s76, %s90
      %p92 = scmp.eq.s32.totalorder %s24, 0
      %p93 = por %p91, %p92
      %s95 = sadd.s32 %s94, 1
      %p98 = scmp.eq.s32.totalorder %s18, 1
      %p99 = scmp.ne.s32.totalorder %s94, %s96
      %p100 = scmp.eq.s32.totalorder %s18, 0
      %p101 = por %p99, %p100
      %p102 = scmp.ne.s32.totalorder %s94, %s96
      %p103 = scmp.eq.s32.totalorder %s23, 1
      %p104 = por %p102, %p103
      %p105 = scmp.ne.s32.totalorder %s96, %s97
      %p106 = scmp.eq.s32.totalorder %s23, 0
      %p107 = por %p105, %p106
      %p108 = scmp.ne.s32.totalorder %s96, %s97
      %p109 = scmp.eq.s32.totalorder %s24, 1
      %p110 = por %p108, %p109
      %p112 = scmp.ne.s32.totalorder %s97, %s111
      %p113 = scmp.eq.s32.totalorder %s24, 0
      %p114 = por %p112, %p113
      %s116 = sadd.s32 %s115, 1
      %p119 = scmp.eq.s32.totalorder %s18, 1
      %p120 = scmp.ne.s32.totalorder %s115, %s117
      %p121 = scmp.eq.s32.totalorder %s18, 0
      %p122 = por %p120, %p121
      %p123 = scmp.ne.s32.totalorder %s115, %s117
      %p124 = scmp.eq.s32.totalorder %s23, 1
      %p125 = por %p123, %p124
      %p126 = scmp.ne.s32.totalorder %s117, %s118
      %p127 = scmp.eq.s32.totalorder %s23, 0
      %p128 = por %p126, %p127
      %p129 = scmp.ne.s32.totalorder %s117, %s118
      %p130 = scmp.eq.s32.totalorder %s24, 1
      %p131 = por %p129, %p130
      %p133 = scmp.ne.s32.totalorder %s118, %s132
      %p134 = scmp.eq.s32.totalorder %s24, 0
      %p135 = por %p133, %p134
      %s136 = ssub.s32 %s18, %s25
      %p137 = scmp.eq.s32.totalorder %s136, 0
      %s139 = sadd.s32 %s138, 1
      %s140 = scalar_select %p137, %s138, %s139
      %p143 = pneg %p137
      %p144 = scmp.eq.s32.totalorder %s18, 1
      %p145 = por %p143, %p144
      %p146 = scmp.ne.s32.totalorder %s138, %s141
      %p147 = scmp.eq.s32.totalorder %s18, 0
      %p148 = por %p146, %p147
      %p149 = scmp.ne.s32.totalorder %s138, %s141
      %p150 = scmp.eq.s32.totalorder %s23, 1
      %p151 = por %p149, %p150
      %p152 = scmp.ne.s32.totalorder %s141, %s142
      %p153 = scmp.eq.s32.totalorder %s23, 0
      %p154 = por %p152, %p153
      %p155 = scmp.ne.s32.totalorder %s141, %s142
      %p156 = scmp.eq.s32.totalorder %s24, 1
      %p157 = por %p155, %p156
      %p159 = scmp.ne.s32.totalorder %s142, %s158
      %p160 = scmp.eq.s32.totalorder %s24, 0
      %p161 = por %p159, %p160
      %p162 = scmp.le.s32.totalorder 1, %s18
      %p163 = scmp.lt.s32.totalorder %s18, 3
      %p164 = pnand %p162, %p163
      %p165 = pneg %p164
      // Predicated region
      $region9: #{tpu_custom_call.1} parent=5 // pred_check
        _
      $region10: #{tpu_custom_call.1} parent=5 // pred_check_branch
        %167 = sbr.rel (%p164) target = $region12
      $region11: #{tpu_custom_call.1} parent=5 // pred_region
        %s168 = ssub.s32 %s18, 1
        // Predicated region
        $region13: #{tpu_custom_call.1} parent=11 // pred_check
          %p169 = pneg %p65
        $region14: #{tpu_custom_call.1} parent=11 // pred_check_branch
          %171 = sbr.rel (%p169) target = $region16
        $region15: #{tpu_custom_call.1} parent=11 // pred_region
          %173 = vsyncadd [#allocation6], 0
          %s174 = sshll.u32 %s1, 4
          %s175 = int_to_ptr.hbm [resolvable:$true] %s174
          %s176 = sshll.u32 [#allocation5], 4
          %s177 = int_to_ptr.vmem [resolvable:$true] %s176
          %182 = dma.hbm_to_vmem [thread:$0]  %s175, 6144, %s177, [#allocation6], 128, 128, 8
        $region16: #{tpu_custom_call.1} parent=11 // pred_fallthru
          _
        // Predicated region
        $region17: #{tpu_custom_call.1} parent=11 // pred_check
          %p183 = pneg %p86
        $region18: #{tpu_custom_call.1} parent=11 // pred_check_branch
          %185 = sbr.rel (%p183) target = $region20
        $region19: #{tpu_custom_call.1} parent=11 // pred_region
          _
        $region20: #{tpu_custom_call.1} parent=11 // pred_fallthru
          _
        // Predicated region
        $region21: #{tpu_custom_call.1} parent=11 // pred_check
          %p186 = pneg %p107
        $region22: #{tpu_custom_call.1} parent=11 // pred_check_branch
          %188 = sbr.rel (%p186) target = $region24
        $region23: #{tpu_custom_call.1} parent=11 // pred_region
          %190 = vsyncadd [#allocation6], 0
          %s191 = sshll.u32 %s3, 4
          %s192 = int_to_ptr.hbm [resolvable:$true] %s191
          %s193 = sshll.u32 [#allocation7], 4
          %s194 = int_to_ptr.vmem [resolvable:$true] %s193
          %199 = dma.hbm_to_vmem [thread:$0]  %s192, 6144, %s194, [#allocation6], 128, 128, 8
        $region24: #{tpu_custom_call.1} parent=11 // pred_fallthru
          _
        // Predicated region
        $region25: #{tpu_custom_call.1} parent=11 // pred_check
          %p200 = pneg %p128
        $region26: #{tpu_custom_call.1} parent=11 // pred_check_branch
          %202 = sbr.rel (%p200) target = $region28
        $region27: #{tpu_custom_call.1} parent=11 // pred_region
          _
        $region28: #{tpu_custom_call.1} parent=11 // pred_fallthru
          _
      $region12: #{tpu_custom_call.1} parent=5 // pred_fallthru
        _
      %p203 = scmp.lt.s32.totalorder %s18, 2
      // Predicated region
      $region29: #{tpu_custom_call.1} parent=5 // pred_check
        %p204 = pneg %p203
      $region30: #{tpu_custom_call.1} parent=5 // pred_check_branch
        %206 = sbr.rel (%p204) target = $region32
      $region31: #{tpu_custom_call.1} parent=5 // pred_region
        // Predicated region
        $region33: #{tpu_custom_call.1} parent=31 // pred_check
          %p207 = pneg %p38
        $region34: #{tpu_custom_call.1} parent=31 // pred_check_branch
          %209 = sbr.rel (%p207) target = $region36
        $region35: #{tpu_custom_call.1} parent=31 // pred_region
          %s210 = sand.u32 %s28, 1
          %s211 = scalar_lea.sflag [#allocation3], %s210
          %s212 = sand.u32 %s28, 1
          %s213 = smul.addr %s212, 16
          %s214 = scalar_lea.vmem [#allocation2], %s213
          %216 = vsyncadd %s211, 0
          %s217 = smul.addr %s18, 2
          %s218 = smul.addr %s217, 8
          %s219 = scalar_lea.hbm %s0, %s218
          %s220 = sshll.u32 %s219, 4
          %s221 = int_to_ptr.hbm [resolvable:$true] %s220
          %s222 = sshll.u32 %s214, 4
          %s223 = int_to_ptr.vmem [resolvable:$true] %s222
          %228 = dma.hbm_to_vmem [thread:$0]  %s221, 256, %s223, %s211, 128, 128, 8
        $region36: #{tpu_custom_call.1} parent=31 // pred_fallthru
          _
      $region32: #{tpu_custom_call.1} parent=5 // pred_fallthru
        _
      %p229 = scmp.le.s32.totalorder 1, %s18
      %p230 = scmp.lt.s32.totalorder %s18, 3
      %p231 = pnand %p229, %p230
      %p232 = pneg %p231
      // Predicated region
      $region37: #{tpu_custom_call.1} parent=5 // pred_check
        _
      $region38: #{tpu_custom_call.1} parent=5 // pred_check_branch
        %234 = sbr.rel (%p231) target = $region40
      $region39: #{tpu_custom_call.1} parent=5 // pred_region
        %s235 = ssub.s32 %s18, 1
        %s236 = sand.u32 %s31, 1
        %s237 = scalar_lea.sflag [#allocation3], %s236
        %s238 = sand.u32 %s31, 1
        %s239 = smul.addr %s238, 16
        %s240 = scalar_lea.vmem [#allocation2], %s239
        // Predicated region
        $region41: #{tpu_custom_call.1} parent=39 // pred_check
          %p241 = pneg %p44
        $region42: #{tpu_custom_call.1} parent=39 // pred_check_branch
          %243 = sbr.rel (%p241) target = $region44
        $region43: #{tpu_custom_call.1} parent=39 // pred_region
          %245 = dma.done %s237, 256
        $region44: #{tpu_custom_call.1} parent=39 // pred_fallthru
          _
        // Predicated region
        $region45: #{tpu_custom_call.1} parent=39 // pred_check
          %p246 = pneg %p65
        $region46: #{tpu_custom_call.1} parent=39 // pred_check_branch
          %248 = sbr.rel (%p246) target = $region48
        $region47: #{tpu_custom_call.1} parent=39 // pred_region
          %250 = dma.done [#allocation6], 6144
        $region48: #{tpu_custom_call.1} parent=39 // pred_fallthru
          _
        // Predicated region
        $region49: #{tpu_custom_call.1} parent=39 // pred_check
          %p251 = pneg %p107
        $region50: #{tpu_custom_call.1} parent=39 // pred_check_branch
          %253 = sbr.rel (%p251) target = $region52
        $region51: #{tpu_custom_call.1} parent=39 // pred_region
          %255 = dma.done [#allocation6], 6144
        $region52: #{tpu_custom_call.1} parent=39 // pred_fallthru
          _
        %s256 = sand.u32 %s31, 1
        %s257 = scalar_lea.sflag [#allocation3], %s256
        %s258 = sand.u32 %s31, 1
        %s259 = smul.addr %s258, 16
        %s260 = scalar_lea.vmem [#allocation2], %s259
        %p261 = pneg %p44
        %p262 = pneg %p41
        %p263 = pneg %p65
        %p264 = pneg %p62
        %p265 = pneg %p86
        %p266 = pneg %p83
        %p267 = pneg %p107
        %p268 = pneg %p104
        %p269 = pneg %p128
        %p270 = pneg %p125
        %p271 = pneg %p154
        %p272 = pneg %p151
        %s273 = sand.u32 %s141, 1
        %s274 = scalar_lea.sflag [#allocation4], %s273
        %s275 = sand.u32 %s141, 1
        %s276 = smul.addr %s275, 16
        %s277 = scalar_lea.vmem [#allocation8], %s276
        %v278 = vld [vmem:[%s240] sm:$0xff]
        %v279 = vld [vmem:[%s240 + $0x8] sm:$0xff]
        %v280 = vld [vmem:[#allocation5] sm:$0xff]
        %v281 = vld [vmem:[#allocation5 + $0x8] sm:$0xff]
        %v282 = vld [vmem:[#allocation5 + $0x10] sm:$0xff]
        %v283 = vld [vmem:[#allocation5 + $0x18] sm:$0xff]
        %v284 = vld [vmem:[#allocation5 + $0x20] sm:$0xff]
        %v285 = vld [vmem:[#allocation5 + $0x28] sm:$0xff]
        %v286 = vld [vmem:[#allocation5 + $0x30] sm:$0xff]
        %v287 = vld [vmem:[#allocation5 + $0x38] sm:$0xff]
        %v288 = vld [vmem:[#allocation5 + $0x40] sm:$0xff]
        %v289 = vld [vmem:[#allocation5 + $0x48] sm:$0xff]
        %v290 = vld [vmem:[#allocation5 + $0x50] sm:$0xff]
        %v291 = vld [vmem:[#allocation5 + $0x58] sm:$0xff]
        %v292 = vld [vmem:[#allocation5 + $0x60] sm:$0xff]
        %v293 = vld [vmem:[#allocation5 + $0x68] sm:$0xff]
        %v294 = vld [vmem:[#allocation5 + $0x70] sm:$0xff]
        %v295 = vld [vmem:[#allocation5 + $0x78] sm:$0xff]
        %296 = vmatpush.msra.mxu0 %v295
        %297 = vmatpush.msra.mxu0 %v294
        %298 = vmatpush.msra.mxu0 %v293
        %299 = vmatpush.msra.mxu0 %v292
        %300 = vmatpush.msra.mxu0 %v291
        %301 = vmatpush.msra.mxu0 %v290
        %302 = vmatpush.msra.mxu0 %v289
        %303 = vmatpush.msra.mxu0 %v288
        %304 = vmatpush.msra.mxu0 %v287
        %305 = vmatpush.msra.mxu0 %v286
        %306 = vmatpush.msra.mxu0 %v285
        %307 = vmatpush.msra.mxu0 %v284
        %308 = vmatpush.msra.mxu0 %v283
        %309 = vmatpush.msra.mxu0 %v282
        %310 = vmatpush.msra.mxu0 %v281
        %311 = vmatpush.msra.mxu0 %v280
        %312 = vmatmul.f32.gmra.mxu0 %v278
        %v313 = vpop.f32.mrf.mxu0
        %v314 = vadd.f32 0.0, %v313
        %315 = vmatmul.f32.gmra.mxu0 %v279
        %v316 = vpop.f32.mrf.mxu0
        %v317 = vadd.f32 0.0, %v316
        %318 = vdwg.mxu0
        %s319 = scalar_lea.vmem [#allocation5], 128
        %v320 = vld [vmem:[%s319] sm:$0xff]
        %v321 = vld [vmem:[%s319 + $0x8] sm:$0xff]
        %v322 = vld [vmem:[%s319 + $0x10] sm:$0xff]
        %v323 = vld [vmem:[%s319 + $0x18] sm:$0xff]
        %v324 = vld [vmem:[%s319 + $0x20] sm:$0xff]
        %v325 = vld [vmem:[%s319 + $0x28] sm:$0xff]
        %v326 = vld [vmem:[%s319 + $0x30] sm:$0xff]
        %v327 = vld [vmem:[%s319 + $0x38] sm:$0xff]
        %v328 = vld [vmem:[%s319 + $0x40] sm:$0xff]
        %v329 = vld [vmem:[%s319 + $0x48] sm:$0xff]
        %v330 = vld [vmem:[%s319 + $0x50] sm:$0xff]
        %v331 = vld [vmem:[%s319 + $0x58] sm:$0xff]
        %v332 = vld [vmem:[%s319 + $0x60] sm:$0xff]
        %v333 = vld [vmem:[%s319 + $0x68] sm:$0xff]
        %v334 = vld [vmem:[%s319 + $0x70] sm:$0xff]
        %v335 = vld [vmem:[%s319 + $0x78] sm:$0xff]
        %336 = vmatpush.msra.mxu0 %v335
        %337 = vmatpush.msra.mxu0 %v334
        %338 = vmatpush.msra.mxu0 %v333
        %339 = vmatpush.msra.mxu0 %v332
        %340 = vmatpush.msra.mxu0 %v331
        %341 = vmatpush.msra.mxu0 %v330
        %342 = vmatpush.msra.mxu0 %v329
        %343 = vmatpush.msra.mxu0 %v328
        %344 = vmatpush.msra.mxu0 %v327
        %345 = vmatpush.msra.mxu0 %v326
        %346 = vmatpush.msra.mxu0 %v325
        %347 = vmatpush.msra.mxu0 %v324
        %348 = vmatpush.msra.mxu0 %v323
        %349 = vmatpush.msra.mxu0 %v322
        %350 = vmatpush.msra.mxu0 %v321
        %351 = vmatpush.msra.mxu0 %v320
        %352 = vmatmul.f32.gmra.mxu0 %v278
        %v353 = vpop.f32.mrf.mxu0
        %v354 = vadd.f32 0.0, %v353
        %355 = vmatmul.f32.gmra.mxu0 %v279
        %v356 = vpop.f32.mrf.mxu0
        %v357 = vadd.f32 0.0, %v356
        %358 = vdwg.mxu0
        %s359 = scalar_lea.vmem [#allocation5], 256
        %v360 = vld [vmem:[%s359] sm:$0xff]
        %v361 = vld [vmem:[%s359 + $0x8] sm:$0xff]
        %v362 = vld [vmem:[%s359 + $0x10] sm:$0xff]
        %v363 = vld [vmem:[%s359 + $0x18] sm:$0xff]
        %v364 = vld [vmem:[%s359 + $0x20] sm:$0xff]
        %v365 = vld [vmem:[%s359 + $0x28] sm:$0xff]
        %v366 = vld [vmem:[%s359 + $0x30] sm:$0xff]
        %v367 = vld [vmem:[%s359 + $0x38] sm:$0xff]
        %v368 = vld [vmem:[%s359 + $0x40] sm:$0xff]
        %v369 = vld [vmem:[%s359 + $0x48] sm:$0xff]
        %v370 = vld [vmem:[%s359 + $0x50] sm:$0xff]
        %v371 = vld [vmem:[%s359 + $0x58] sm:$0xff]
        %v372 = vld [vmem:[%s359 + $0x60] sm:$0xff]
        %v373 = vld [vmem:[%s359 + $0x68] sm:$0xff]
        %v374 = vld [vmem:[%s359 + $0x70] sm:$0xff]
        %v375 = vld [vmem:[%s359 + $0x78] sm:$0xff]
        %376 = vmatpush.msra.mxu0 %v375
        %377 = vmatpush.msra.mxu0 %v374
        %378 = vmatpush.msra.mxu0 %v373
        %379 = vmatpush.msra.mxu0 %v372
        %380 = vmatpush.msra.mxu0 %v371
        %381 = vmatpush.msra.mxu0 %v370
        %382 = vmatpush.msra.mxu0 %v369
        %383 = vmatpush.msra.mxu0 %v368
        %384 = vmatpush.msra.mxu0 %v367
        %385 = vmatpush.msra.mxu0 %v366
        %386 = vmatpush.msra.mxu0 %v365
        %387 = vmatpush.msra.mxu0 %v364
        %388 = vmatpush.msra.mxu0 %v363
        %389 = vmatpush.msra.mxu0 %v362
        %390 = vmatpush.msra.mxu0 %v361
        %391 = vmatpush.msra.mxu0 %v360
        %392 = vmatmul.f32.gmra.mxu0 %v278
        %v393 = vpop.f32.mrf.mxu0
        %v394 = vadd.f32 0.0, %v393
        %395 = vmatmul.f32.gmra.mxu0 %v279
        %v396 = vpop.f32.mrf.mxu0
        %v397 = vadd.f32 0.0, %v396
        %398 = vdwg.mxu0
        %vm401 = vcmask 1040384
        %v402 = vrot.slane %v314, 7
        %v403 = vrot.slane %v317, 7
        %v404 = vsel %vm401, %v402, %v403
        %v407 = vsel %vm401, 0.0, %v402
        %vm410 = vcmask 1046528
        %v411 = vrot.slane %v394, 1
        %v412 = vrot.slane %v397, 1
        %v413 = vsel %vm410, %v411, %v412
        %v416 = vsel %vm410, %v412, 0.0
        %v417 = vadd.f32 %v407, %v354
        %v418 = vadd.f32 %v404, %v357
        %v419 = vadd.f32 %v417, %v413
        %v420 = vadd.f32 %v418, %v416
        %v421 = vld [vmem:[%s2] sm:$0x1]
        %v423 = vperm.slane %v421, 0
        %v425 = vadd.f32 %v419, %v423
        %v426 = vadd.f32 %v420, %v423
        %v427 = vmax.f32 %v425, 0.0
        %v428 = vmax.f32 %v426, 0.0
        %v429 = vld [vmem:[#allocation7] sm:$0xff]
        %v430 = vld [vmem:[#allocation7 + $0x8] sm:$0xff]
        %v431 = vld [vmem:[#allocation7 + $0x10] sm:$0xff]
        %v432 = vld [vmem:[#allocation7 + $0x18] sm:$0xff]
        %v433 = vld [vmem:[#allocation7 + $0x20] sm:$0xff]
        %v434 = vld [vmem:[#allocation7 + $0x28] sm:$0xff]
        %v435 = vld [vmem:[#allocation7 + $0x30] sm:$0xff]
        %v436 = vld [vmem:[#allocation7 + $0x38] sm:$0xff]
        %v437 = vld [vmem:[#allocation7 + $0x40] sm:$0xff]
        %v438 = vld [vmem:[#allocation7 + $0x48] sm:$0xff]
        %v439 = vld [vmem:[#allocation7 + $0x50] sm:$0xff]
        %v440 = vld [vmem:[#allocation7 + $0x58] sm:$0xff]
        %v441 = vld [vmem:[#allocation7 + $0x60] sm:$0xff]
        %v442 = vld [vmem:[#allocation7 + $0x68] sm:$0xff]
        %v443 = vld [vmem:[#allocation7 + $0x70] sm:$0xff]
        %v444 = vld [vmem:[#allocation7 + $0x78] sm:$0xff]
        %445 = vmatpush.msra.mxu0 %v444
        %446 = vmatpush.msra.mxu0 %v443
        %447 = vmatpush.msra.mxu0 %v442
        %448 = vmatpush.msra.mxu0 %v441
        %449 = vmatpush.msra.mxu0 %v440
        %450 = vmatpush.msra.mxu0 %v439
        %451 = vmatpush.msra.mxu0 %v438
        %452 = vmatpush.msra.mxu0 %v437
        %453 = vmatpush.msra.mxu0 %v436
        %454 = vmatpush.msra.mxu0 %v435
        %455 = vmatpush.msra.mxu0 %v434
        %456 = vmatpush.msra.mxu0 %v433
        %457 = vmatpush.msra.mxu0 %v432
        %458 = vmatpush.msra.mxu0 %v431
        %459 = vmatpush.msra.mxu0 %v430
        %460 = vmatpush.msra.mxu0 %v429
        %461 = vmatmul.f32.gmra.mxu0 %v427
        %v462 = vpop.f32.mrf.mxu0
        %v463 = vadd.f32 0.0, %v462
        %464 = vmatmul.f32.gmra.mxu0 %v428
        %v465 = vpop.f32.mrf.mxu0
        %v466 = vadd.f32 0.0, %v465
        %467 = vdwg.mxu0
        %s468 = scalar_lea.vmem [#allocation7], 128
        %v469 = vld [vmem:[%s468] sm:$0xff]
        %v470 = vld [vmem:[%s468 + $0x8] sm:$0xff]
        %v471 = vld [vmem:[%s468 + $0x10] sm:$0xff]
        %v472 = vld [vmem:[%s468 + $0x18] sm:$0xff]
        %v473 = vld [vmem:[%s468 + $0x20] sm:$0xff]
        %v474 = vld [vmem:[%s468 + $0x28] sm:$0xff]
        %v475 = vld [vmem:[%s468 + $0x30] sm:$0xff]
        %v476 = vld [vmem:[%s468 + $0x38] sm:$0xff]
        %v477 = vld [vmem:[%s468 + $0x40] sm:$0xff]
        %v478 = vld [vmem:[%s468 + $0x48] sm:$0xff]
        %v479 = vld [vmem:[%s468 + $0x50] sm:$0xff]
        %v480 = vld [vmem:[%s468 + $0x58] sm:$0xff]
        %v481 = vld [vmem:[%s468 + $0x60] sm:$0xff]
        %v482 = vld [vmem:[%s468 + $0x68] sm:$0xff]
        %v483 = vld [vmem:[%s468 + $0x70] sm:$0xff]
        %v484 = vld [vmem:[%s468 + $0x78] sm:$0xff]
        %485 = vmatpush.msra.mxu0 %v484
        %486 = vmatpush.msra.mxu0 %v483
        %487 = vmatpush.msra.mxu0 %v482
        %488 = vmatpush.msra.mxu0 %v481
        %489 = vmatpush.msra.mxu0 %v480
        %490 = vmatpush.msra.mxu0 %v479
        %491 = vmatpush.msra.mxu0 %v478
        %492 = vmatpush.msra.mxu0 %v477
        %493 = vmatpush.msra.mxu0 %v476
        %494 = vmatpush.msra.mxu0 %v475
        %495 = vmatpush.msra.mxu0 %v474
        %496 = vmatpush.msra.mxu0 %v473
        %497 = vmatpush.msra.mxu0 %v472
        %498 = vmatpush.msra.mxu0 %v471
        %499 = vmatpush.msra.mxu0 %v470
        %500 = vmatpush.msra.mxu0 %v469
        %501 = vmatmul.f32.gmra.mxu0 %v427
        %v502 = vpop.f32.mrf.mxu0
        %v503 = vadd.f32 0.0, %v502
        %504 = vmatmul.f32.gmra.mxu0 %v428
        %v505 = vpop.f32.mrf.mxu0
        %v506 = vadd.f32 0.0, %v505
        %507 = vdwg.mxu0
        %s508 = scalar_lea.vmem [#allocation7], 256
        %v509 = vld [vmem:[%s508] sm:$0xff]
        %v510 = vld [vmem:[%s508 + $0x8] sm:$0xff]
        %v511 = vld [vmem:[%s508 + $0x10] sm:$0xff]
        %v512 = vld [vmem:[%s508 + $0x18] sm:$0xff]
        %v513 = vld [vmem:[%s508 + $0x20] sm:$0xff]
        %v514 = vld [vmem:[%s508 + $0x28] sm:$0xff]
        %v515 = vld [vmem:[%s508 + $0x30] sm:$0xff]
        %v516 = vld [vmem:[%s508 + $0x38] sm:$0xff]
        %v517 = vld [vmem:[%s508 + $0x40] sm:$0xff]
        %v518 = vld [vmem:[%s508 + $0x48] sm:$0xff]
        %v519 = vld [vmem:[%s508 + $0x50] sm:$0xff]
        %v520 = vld [vmem:[%s508 + $0x58] sm:$0xff]
        %v521 = vld [vmem:[%s508 + $0x60] sm:$0xff]
        %v522 = vld [vmem:[%s508 + $0x68] sm:$0xff]
        %v523 = vld [vmem:[%s508 + $0x70] sm:$0xff]
        %v524 = vld [vmem:[%s508 + $0x78] sm:$0xff]
        %525 = vmatpush.msra.mxu0 %v524
        %526 = vmatpush.msra.mxu0 %v523
        %527 = vmatpush.msra.mxu0 %v522
        %528 = vmatpush.msra.mxu0 %v521
        %529 = vmatpush.msra.mxu0 %v520
        %530 = vmatpush.msra.mxu0 %v519
        %531 = vmatpush.msra.mxu0 %v518
        %532 = vmatpush.msra.mxu0 %v517
        %533 = vmatpush.msra.mxu0 %v516
        %534 = vmatpush.msra.mxu0 %v515
        %535 = vmatpush.msra.mxu0 %v514
        %536 = vmatpush.msra.mxu0 %v513
        %537 = vmatpush.msra.mxu0 %v512
        %538 = vmatpush.msra.mxu0 %v511
        %539 = vmatpush.msra.mxu0 %v510
        %540 = vmatpush.msra.mxu0 %v509
        %541 = vmatmul.f32.gmra.mxu0 %v427
        %v542 = vpop.f32.mrf.mxu0
        %v543 = vadd.f32 0.0, %v542
        %544 = vmatmul.f32.gmra.mxu0 %v428
        %v545 = vpop.f32.mrf.mxu0
        %v546 = vadd.f32 0.0, %v545
        %547 = vdwg.mxu0
        %v550 = vrot.slane %v463, 7
        %v551 = vrot.slane %v466, 7
        %v552 = vsel %vm401, %v550, %v551
        %v555 = vsel %vm401, 0.0, %v550
        %v558 = vrot.slane %v543, 1
        %v559 = vrot.slane %v546, 1
        %v560 = vsel %vm410, %v558, %v559
        %v563 = vsel %vm410, %v559, 0.0
        %v564 = vadd.f32 %v555, %v503
        %v565 = vadd.f32 %v552, %v506
        %v566 = vadd.f32 %v564, %v560
        %v567 = vadd.f32 %v565, %v563
        %v568 = vld [vmem:[%s4] sm:$0x1]
        %v570 = vperm.slane %v568, 0
        %v572 = vadd.f32 %v566, %v570
        %v573 = vadd.f32 %v567, %v570
        %v574 = vadd.f32 %v572, %v278
        %v575 = vadd.f32 %v573, %v279
        %v576 = vmax.f32 %v574, 0.0
        %v577 = vmax.f32 %v575, 0.0
        %578 = vst [vmem:[%s277] sm:$0xff] %v576
        %579 = vst [vmem:[%s277 + $0x8] sm:$0xff] %v577
        %s580 = sand.u32 %s141, 1
        %s581 = scalar_lea.sflag [#allocation4], %s580
        %s582 = sand.u32 %s141, 1
        %s583 = smul.addr %s582, 16
        %s584 = scalar_lea.vmem [#allocation8], %s583
        // Predicated region
        $region53: #{tpu_custom_call.1} parent=39 // pred_check
          %p585 = pneg %p151
        $region54: #{tpu_custom_call.1} parent=39 // pred_check_branch
          %587 = sbr.rel (%p585) target = $region56
        $region55: #{tpu_custom_call.1} parent=39 // pred_region
          %589 = vsyncadd %s581, 0
          %s590 = smul.addr %s23, 2
          %s591 = smul.addr %s590, 8
          %s592 = scalar_lea.hbm %s5, %s591
          %s593 = sshll.u32 %s584, 4
          %s594 = int_to_ptr.vmem [resolvable:$true] %s593
          %s595 = sshll.u32 %s592, 4
          %s596 = int_to_ptr.hbm [resolvable:$true] %s595
          %601 = dma.vmem_to_hbm [thread:$0]  %s594, 256, %s596, %s581, 128, 128, 8
        $region56: #{tpu_custom_call.1} parent=39 // pred_fallthru
          _
      $region40: #{tpu_custom_call.1} parent=5 // pred_fallthru
        _
      %p602 = scmp.le.s32.totalorder 2, %s18
      // Predicated region
      $region57: #{tpu_custom_call.1} parent=5 // pred_check
        %p603 = pneg %p602
      $region58: #{tpu_custom_call.1} parent=5 // pred_check_branch
        %605 = sbr.rel (%p603) target = $region60
      $region59: #{tpu_custom_call.1} parent=5 // pred_region
        %s606 = ssub.s32 %s18, 2
        // Predicated region
        $region61: #{tpu_custom_call.1} parent=59 // pred_check
          %p607 = pneg %p157
        $region62: #{tpu_custom_call.1} parent=59 // pred_check_branch
          %609 = sbr.rel (%p607) target = $region64
        $region63: #{tpu_custom_call.1} parent=59 // pred_region
          %s610 = sand.u32 %s142, 1
          %s611 = scalar_lea.sflag [#allocation4], %s610
          %s612 = sand.u32 %s142, 1
          %s613 = smul.addr %s612, 16
          %s614 = scalar_lea.vmem [#allocation8], %s613
          %616 = dma.done %s611, 256
        $region64: #{tpu_custom_call.1} parent=59 // pred_fallthru
          _
      $region60: #{tpu_custom_call.1} parent=5 // pred_fallthru
        _
    $region6: #{tpu_custom_call.1} parent=1 // loop_footer
      %s22 = sadd.s32 1, %s18
    $region7: #{tpu_custom_call.1} parent=1 // loop_footer_branch
      %17 = sbr.rel target = $region3
    $region8: #{tpu_custom_call.1} parent=1 // loop_exit
      _
    %617 = vsyncpa [#allocation3], 1
    %s618 = scalar_lea.sflag [#allocation3], 1
    %619 = vsyncpa %s618, 1
    %620 = vsyncpa [#allocation6], 1
    %621 = vsyncpa [#allocation4], 1
    %s622 = scalar_lea.sflag [#allocation4], 1
    %623 = vsyncpa %s622, 1

</llo_original>
